<compile_context>
chip_gen: v7x
topology: tpu7x:2x2x1
jax: 0.10.0
libtpu: 0.0.40
codegen_flags: <defaults>
</compile_context>

<pallas_src>
import functools
import math

import jax
import jax.numpy as jnp
from jax.experimental import pallas as pl
from jax.experimental.pallas import tpu as pltpu


def _round_up(x, m):
    return ((x + m - 1) // m) * m


def _pick_hidden_tile(hidden, preferred, align=128):
    """Largest multiple of `align` <= preferred that divides hidden (else hidden)."""
    if hidden <= preferred:
        return hidden
    t = (preferred // align) * align
    while t >= align:
        if hidden % t == 0:
            return t
        t -= align
    return hidden  # fallback: no hidden tiling


def _vmem_capacity_bytes():
    """Physical VMEM per core; conservative 64 MiB (v7x) fallback."""
    try:
        return int(pltpu.get_tpu_info().vmem_capacity_bytes)
    except Exception:
        return 64 * 1024 * 1024


def prepare_weights(w1, w2, dtype=jnp.bfloat16):
    """One-time (parameter-load time) weight prep.

    w1: (hidden, in)  -- PyTorch fc1.weight layout
    w2: (out, hidden) -- PyTorch fc2.weight layout
    Returns (w1t, w2t, out_features):
      w1t: (in, hidden_pad), w2t: (hidden_pad, out_pad), cast to `dtype`.
    hidden is zero-padded to a multiple of 128 (exact: gelu(0)*0 == 0) and
    out is zero-padded to a multiple of 128 for lane-dense (unmasked) stores;
    the wrapper slices the output padding off using `out_features`.
    """
    hidden, _in = w1.shape
    out_features, hidden2 = w2.shape
    assert hidden == hidden2, "fc1/fc2 hidden dims must match"
    hidden_pad = _round_up(hidden, 128)
    out_pad = _round_up(out_features, 128)
    w1t = jnp.asarray(w1, dtype).T  # (in, hidden)
    w2t = jnp.asarray(w2, dtype).T  # (hidden, out)
    if hidden_pad != hidden:
        w1t = jnp.pad(w1t, ((0, 0), (0, hidden_pad - hidden)))
        w2t = jnp.pad(w2t, ((0, hidden_pad - hidden), (0, 0)))
    if out_pad != out_features:
        w2t = jnp.pad(w2t, ((0, 0), (0, out_pad - out_features)))
    return w1t, w2t, out_features


# ---------------------------------------------------------------------------
# Kernels
# ---------------------------------------------------------------------------

def _mlp_kernel_resident(x_ref, w1t_ref, w2t_ref, o_ref):
    """Weights fully resident in VMEM; 1-D grid over M tiles."""
    x = x_ref[...]
    if x.dtype != w1t_ref.dtype:
        x = x.astype(w1t_ref.dtype)
    h = jnp.dot(x, w1t_ref[...], preferred_element_type=jnp.float32)
    h = jax.nn.gelu(h, approximate=True)
    o_ref[...] = jnp.dot(h.astype(w2t_ref.dtype), w2t_ref[...],
                         preferred_element_type=jnp.float32).astype(o_ref.dtype)


def _mlp_kernel_tiled(x_ref, w1t_ref, w2t_ref, o_ref, *scratch):
    """Hidden-tiled path; f32 accumulation across the hidden (last) grid axis.

    If `scratch` is empty the output dtype is f32 and we accumulate directly
    into the resident output block (saves VMEM + the final copy)."""
    acc_ref = scratch[0] if scratch else o_ref
    h_idx = pl.program_id(1)

    @pl.when(h_idx == 0)
    def _():
        acc_ref[...] = jnp.zeros_like(acc_ref)

    x = x_ref[...]
    if x.dtype != w1t_ref.dtype:
        x = x.astype(w1t_ref.dtype)
    # fc1 partial: (tm, in) @ (in, th) -> f32 on the MXU.
    h = jnp.dot(x, w1t_ref[...], preferred_element_type=jnp.float32)
    # GELU (tanh approx) in f32; elementwise over hidden so hidden-tiling is exact.
    h = jax.nn.gelu(h, approximate=True)
    # fc2 partial: (tm, th) @ (th, out_pad), accumulated in f32 across hidden tiles.
    acc_ref[...] += jnp.dot(h.astype(w2t_ref.dtype), w2t_ref[...],
                            preferred_element_type=jnp.float32)

    if scratch:
        @pl.when(h_idx == pl.num_programs(1) - 1)
        def _():
            o_ref[...] = acc_ref[...].astype(o_ref.dtype)


# ---------------------------------------------------------------------------
# Tile planner
# ---------------------------------------------------------------------------

def _plan_tiles(m, in_f, hidden, out_pad, x_bytes, w_bytes, o_bytes,
                use_scratch, tm_pref, th_pref, vmem_budget, mode):
    """Pick (path, tm, th, vmem_estimate) fitting the per-device VMEM budget."""
    tm_cap = max(16, min(tm_pref, _round_up(m, 16)))  # 16: bf16 sublane packing
    tm_cands = sorted({t for t in (tm_cap, 1024, 512, 256, 128, 64, 32, 16)
                       if t <= tm_cap}, reverse=True)

    weight_bytes = (in_f * hidden + hidden * out_pad) * w_bytes

    def resident_est(tm):
        return (weight_bytes                     # weights, single VMEM copy
                + 2 * tm * in_f * x_bytes        # double-buffered x tile
                + 2 * tm * out_pad * o_bytes     # double-buffered out tile
                + tm * hidden * 6                # f32 fc1 result + bf16 gelu operand
                + tm * out_pad * 4)              # f32 fc2 result before downcast

    def tiled_est(tm, th):
        return (2 * (tm * in_f * x_bytes + in_f * th * w_bytes
                     + th * out_pad * w_bytes + tm * out_pad * o_bytes)
                + (tm * out_pad * 4 if use_scratch else 0)
                + tm * th * 6)

    if mode in ("auto", "resident"):
        for tm in tm_cands:
            est = resident_est(tm)
            if est <= vmem_budget:
                return "resident", tm, hidden, est
        if mode == "resident":
            tm = tm_cands[-1]
            return "resident", tm, hidden, resident_est(tm)

    th_cands = []
    for t in (th_pref, 1024, 512, 256, 128):
        te = _pick_hidden_tile(hidden, t)
        if te not in th_cands:
            th_cands.append(te)
    for tm in tm_cands:          # tm first: it sets weight-stream intensity
        for th in th_cands:
            est = tiled_est(tm, th)
            if est <= vmem_budget:
                return "tiled", tm, th, est
    tm, th = tm_cands[-1], min(th_cands)
    return "tiled", tm, th, tiled_est(tm, th)


# ---------------------------------------------------------------------------
# Wrapper
# ---------------------------------------------------------------------------

@functools.partial(jax.jit,
                   static_argnames=("out_features", "tm", "th", "out_dtype", "mode"))
def mlp_pallas(x, w1t, w2t, *, out_features=None, tm=1024, th=1024,
               out_dtype=None, mode="auto"):
    """x: (..., in); (w1t, w2t, out_features) from prepare_weights.

    mode: "auto" (pick weights-resident path when it fits VMEM), "resident",
          or "tiled" (force hidden-tiled reduction path).
    """
    in_features = x.shape[-1]
    assert w1t.shape[0] == in_features
    hidden = w1t.shape[1]
    assert w2t.shape[0] == hidden
    out_pad = w2t.shape[1]
    if out_features is None:
        out_features = out_pad
    assert out_features <= out_pad
    if out_dtype is None:
        out_dtype = x.dtype
    out_dtype = jnp.dtype(out_dtype)
    use_scratch = out_dtype != jnp.dtype(jnp.float32)

    lead = x.shape[:-1]
    m = math.prod(lead) if lead else 1
    x2d = x.reshape(m, in_features)

    x_bytes = jnp.dtype(x2d.dtype).itemsize
    w_bytes = jnp.dtype(w1t.dtype).itemsize
    o_bytes = out_dtype.itemsize

    vmem_cap = _vmem_capacity_bytes()
    vmem_budget = int(vmem_cap * 0.8)

    path, tm_eff, th_eff, est = _plan_tiles(
        m, in_features, hidden, out_pad, x_bytes, w_bytes, o_bytes,
        use_scratch, tm, th, vmem_budget, mode)

    m_pad = _round_up(m, tm_eff)
    if m_pad != m:
        # TODO(synk): handle the M remainder with a masked partial last tile
        # (cdiv grid) instead of materializing a padded copy of x.
        x2d = jnp.pad(x2d, ((0, m_pad - m), (0, 0)))

    if path == "resident":
        grid = (m_pad // tm_eff,)
        in_specs = [
            pl.BlockSpec((tm_eff, in_features), lambda i: (i, 0)),
            # Whole weight matrices live in VMEM: copied from HBM exactly once
            # and reused across all M tiles (no per-tile weight streaming).
            pl.BlockSpec(memory_space=pltpu.MemorySpace.VMEM),
            pl.BlockSpec(memory_space=pltpu.MemorySpace.VMEM),
        ]
        out_specs = pl.BlockSpec((tm_eff, out_pad), lambda i: (i, 0))
        scratch_shapes = []
        kernel = _mlp_kernel_resident
        dim_sem = ("parallel",)
    else:
        grid = (m_pad // tm_eff, hidden // th_eff)
        in_specs = [
            pl.BlockSpec((tm_eff, in_features), lambda i, h: (i, 0)),
            pl.BlockSpec((in_features, th_eff), lambda i, h: (0, h)),
            pl.BlockSpec((th_eff, out_pad), lambda i, h: (h, 0)),
        ]
        out_specs = pl.BlockSpec((tm_eff, out_pad), lambda i, h: (i, 0))
        scratch_shapes = ([pltpu.VMEM((tm_eff, out_pad), jnp.float32)]
                          if use_scratch else [])
        kernel = _mlp_kernel_tiled
        dim_sem = ("parallel", "arbitrary")

    # Explicit VMEM budget from the tile plan; never above physical VMEM (v7x!).
    vmem_limit = min(vmem_cap, max(32 * 1024 * 1024, int(1.3 * est)))

    out2d = pl.pallas_call(
        kernel,
        out_shape=jax.ShapeDtypeStruct((m_pad, out_pad), out_dtype),
        grid_spec=pltpu.PrefetchScalarGridSpec(
            num_scalar_prefetch=0,
            grid=grid,
            in_specs=in_specs,
            out_specs=out_specs,
            scratch_shapes=scratch_shapes,
        ),
        compiler_params=pltpu.CompilerParams(
            dimension_semantics=dim_sem,
            vmem_limit_bytes=vmem_limit,
        ),
    )(x2d, w1t, w2t)

    if m_pad != m:
        out2d = out2d[:m]
    if out_pad != out_features:
        out2d = out2d[:, :out_features]
    return out2d.reshape(*lead, out_features)


def mlp_reference(x, w1, w2, compute_dtype=jnp.bfloat16):
    """Reference matching the kernel's bf16-matmul / f32-accumulate recipe."""
    xc = x.astype(compute_dtype)
    h = jnp.dot(xc, jnp.asarray(w1, compute_dtype).T,
                preferred_element_type=jnp.float32)
    h = jax.nn.gelu(h, approximate=True)
    out = jnp.dot(h.astype(compute_dtype), jnp.asarray(w2, compute_dtype).T,
                  preferred_element_type=jnp.float32)
    return out  # f32


if __name__ == "__main__":
    key = jax.random.PRNGKey(0)
    kx, k1, k2, k3, k4, kx2 = jax.random.split(key, 6)

    def check(out, ref, name):
        out = jax.block_until_ready(out)
        assert out.shape == ref.shape, (name, out.shape, ref.shape)
        ok = jnp.allclose(out.astype(jnp.float32), ref, atol=3e-2, rtol=3e-2)
        assert bool(ok), f"mismatch vs reference: {name}"

    # ---- Config A: lane-aligned dims; small M exercises the row-pad path. ----
    batch, seq = 2, 9
    in_f, hid, out_f = 256, 512, 256
    x = jax.random.normal(kx, (batch, seq, in_f), dtype=jnp.float32)
    # PyTorch nn.Linear weight layout: (out, in).
    w1 = jax.random.normal(k1, (hid, in_f), dtype=jnp.float32) * 0.05
    w2 = jax.random.normal(k2, (out_f, hid), dtype=jnp.float32) * 0.05
    w1t, w2t, out_true = prepare_weights(w1, w2)
    ref = mlp_reference(x, w1, w2)

    # Auto path (small weights -> weights-resident in VMEM), f32 output.
    check(mlp_pallas(x, w1t, w2t, out_features=out_true), ref, "auto/resident f32")
    # Forced hidden-tiled path, f32 output (direct accumulation into o_ref).
    check(mlp_pallas(x, w1t, w2t, out_features=out_true, mode="tiled", th=256),
          ref, "tiled f32")
    # Forced hidden-tiled path, bf16 output (f32 VMEM scratch accumulator).
    check(mlp_pallas(x, w1t, w2t, out_features=out_true, mode="tiled", th=256,
                     out_dtype=jnp.bfloat16), ref, "tiled bf16")

    # ---- Config B: non-128-multiple hidden/out exercises padding + slicing. ----
    in2, hid2, out2 = 256, 200, 192
    x2 = jax.random.normal(kx2, (3, 5, in2), dtype=jnp.float32)
    w1b = jax.random.normal(k3, (hid2, in2), dtype=jnp.float32) * 0.05
    w2b = jax.random.normal(k4, (out2, hid2), dtype=jnp.float32) * 0.05
    w1bt, w2bt, outb = prepare_weights(w1b, w2b)
    check(mlp_pallas(x2, w1bt, w2bt, out_features=outb),
          mlp_reference(x2, w1b, w2b), "padded hidden/out dims")

    print("KERNEL_OK")
</pallas_src>

<mosaic_0001>
module attributes {stable_mosaic.version = 11 : i64} {
  func.func @_mlp_kernel_resident(%arg0: i32, %arg1: memref<32x256xf32, #tpu.memory_space<vmem>>, %arg2: memref<256x512xbf16, #tpu.memory_space<vmem>>, %arg3: memref<512x256xbf16, #tpu.memory_space<vmem>>, %arg4: memref<32x256xf32, #tpu.memory_space<vmem>>) attributes {dimension_semantics = [#tpu.dimension_semantics<parallel>], iteration_bounds = array<i64: 1>, scalar_prefetch = 0 : i64, scratch_operands = 0 : i64, tpu.core_type = #tpu.core_type<tc>, window_params = [{transform_indices = @transform_0, window_bounds = array<i64: 32, 256>}, {pipeline_mode = #tpu.pipeline_mode<synchronous>, transform_indices = @transform_1, window_bounds = array<i64: 256, 512>}, {pipeline_mode = #tpu.pipeline_mode<synchronous>, transform_indices = @transform_2, window_bounds = array<i64: 512, 256>}, {transform_indices = @transform_3, window_bounds = array<i64: 32, 256>}]} {
    %c0 = arith.constant 0 : index
    %c0_0 = arith.constant 0 : index
    %0 = vector.load %arg1[%c0, %c0_0] : memref<32x256xf32, #tpu.memory_space<vmem>>, vector<32x256xf32>
    %1 = arith.truncf %0 : vector<32x256xf32> to vector<32x256xbf16>
    %c0_1 = arith.constant 0 : index
    %c0_2 = arith.constant 0 : index
    %2 = vector.load %arg2[%c0_1, %c0_2] : memref<256x512xbf16, #tpu.memory_space<vmem>>, vector<256x512xbf16>
    %cst = arith.constant dense<0.000000e+00> : vector<32x512xf32>
    %3 = tpu.matmul %1, %2, %cst {dimension_numbers = #tpu.dot_dimension_numbers<[1], [0], [0], [1], [0, 0, 1, 1], [], []>} : vector<32x256xbf16>, vector<256x512xbf16>, vector<32x512xf32> -> vector<32x512xf32>
    %4 = arith.mulf %3, %3 : vector<32x512xf32>
    %5 = arith.mulf %3, %4 : vector<32x512xf32>
    %cst_3 = arith.constant 4.471500e-02 : f32
    %6 = vector.broadcast %cst_3 : f32 to vector<32x512xf32>
    %7 = arith.mulf %6, %5 : vector<32x512xf32>
    %8 = arith.addf %3, %7 : vector<32x512xf32>
    %cst_4 = arith.constant 0.797884583 : f32
    %9 = vector.broadcast %cst_4 : f32 to vector<32x512xf32>
    %10 = arith.mulf %9, %8 : vector<32x512xf32>
    %11 = math.tanh %10 : vector<32x512xf32>
    %cst_5 = arith.constant 1.000000e+00 : f32
    %12 = vector.broadcast %cst_5 : f32 to vector<32x512xf32>
    %13 = arith.addf %12, %11 : vector<32x512xf32>
    %cst_6 = arith.constant 5.000000e-01 : f32
    %14 = vector.broadcast %cst_6 : f32 to vector<32x512xf32>
    %15 = arith.mulf %14, %13 : vector<32x512xf32>
    %16 = arith.mulf %3, %15 : vector<32x512xf32>
    %17 = arith.truncf %16 : vector<32x512xf32> to vector<32x512xbf16>
    %c0_7 = arith.constant 0 : index
    %c0_8 = arith.constant 0 : index
    %18 = vector.load %arg3[%c0_7, %c0_8] : memref<512x256xbf16, #tpu.memory_space<vmem>>, vector<512x256xbf16>
    %cst_9 = arith.constant dense<0.000000e+00> : vector<32x256xf32>
    %19 = tpu.matmul %17, %18, %cst_9 {dimension_numbers = #tpu.dot_dimension_numbers<[1], [0], [0], [1], [0, 0, 1, 1], [], []>} : vector<32x512xbf16>, vector<512x256xbf16>, vector<32x256xf32> -> vector<32x256xf32>
    %c0_10 = arith.constant 0 : index
    %c0_11 = arith.constant 0 : index
    %20 = vector.load %arg4[%c0_10, %c0_11] : memref<32x256xf32, #tpu.memory_space<vmem>>, vector<32x256xf32>
    tpu.vector_store %arg4[%c0_10, %c0_11], %19 {strides = array<i32>} : memref<32x256xf32, #tpu.memory_space<vmem>>, vector<32x256xf32>,
    return
  }
  func.func @transform_0(%arg0: i32) -> (i32, i32) {
    %c0_i32 = arith.constant 0 : i32
    %c0_i32_0 = arith.constant 0 : i32
    return %arg0, %c0_i32 : i32, i32
  }
  func.func @transform_1(%arg0: i32) -> (i32, i32) {
    %c0_i32 = arith.constant 0 : i32
    %c0_i32_0 = arith.constant 0 : i32
    %c0_i32_1 = arith.constant 0 : i32
    return %c0_i32, %c0_i32_0 : i32, i32
  }
  func.func @transform_2(%arg0: i32) -> (i32, i32) {
    %c0_i32 = arith.constant 0 : i32
    %c0_i32_0 = arith.constant 0 : i32
    %c0_i32_1 = arith.constant 0 : i32
    return %c0_i32, %c0_i32_0 : i32, i32
  }
  func.func @transform_3(%arg0: i32) -> (i32, i32) {
    %c0_i32 = arith.constant 0 : i32
    %c0_i32_0 = arith.constant 0 : i32
    return %arg0, %c0_i32 : i32, i32
  }
}

</mosaic_0001>

<llo_original>
// kernel: mlp_pallas.1
$region0: #{mlp_pallas.1}
  #allocation0 [shape = 'u32[]', space=smem, size = 0x4, offset = 0x4, fixed_abs, tag = 'smem constant byte address 0x4 - core index']
  #allocation1 [shape = 'u32[144,128]{1,0:T(1,128)}', space=vmem, size = 0x12000, scoped, tag = 'internal scratch']
  %s0 = inlined_call_operand.vmem [shape: f32[32,256], index: 0, kind: input, shape index: {}]
  %s1 = inlined_call_operand.hbm [shape: bf16[256,512], index: 1, kind: input, shape index: {}]
  %s2 = inlined_call_operand.hbm [shape: bf16[512,256], index: 2, kind: input, shape index: {}]
  %s3 = inlined_call_operand.vmem [shape: f32[32,256], index: 3, kind: output, shape index: {}]
  %s4 = sld [smem:[#allocation0]]
  $region30: #{mlp_pallas.1} parent=0
    _
  %s6 = ssub.s32 1, %s4
  %s7 = scalar_select 0, %s6, %s4
  $region1: #{mlp_pallas.1} parent=0
    #allocation2 [shape = 'u8[262144]{0}', space=vmem, size = 0x40000, scoped, tag = 'input window, operand 1, single buffered']
    #allocation3 [shape = 's32[1]{0}', space=sflag, size = 0x4, scoped, tag = 'scoped memory for mlp_pallas.1']
    #allocation4 [shape = 'u8[262144]{0}', space=vmem, size = 0x40000, scoped, tag = 'input window, operand 2, single buffered']
    #allocation5 [shape = 's32[1]{0}', space=sflag, size = 0x4, scoped, tag = 'scoped memory for mlp_pallas.1']
    %8 = vsyncpa [#allocation3], 0
    %9 = vsyncpa [#allocation5], 0
    // Predicated region
    $region2: #{mlp_pallas.1} parent=1 // pred_check
      _
    $region3: #{mlp_pallas.1} parent=1 // pred_check_branch
      %11 = sbr.rel (0) target = $region5
    $region4: #{mlp_pallas.1} parent=1 // pred_region
      _
    $region5: #{mlp_pallas.1} parent=1 // pred_fallthru
      _
    // Predicated region
    $region6: #{mlp_pallas.1} parent=1 // pred_check
      _
    $region7: #{mlp_pallas.1} parent=1 // pred_check_branch
      %13 = sbr.rel (0) target = $region9
    $region8: #{mlp_pallas.1} parent=1 // pred_region
      %s15 = ssub.s32 8192, 8192
      %16 = vsyncadd [#allocation3], %s15
      %s17 = sshll.u32 [#allocation2], 4
      %s18 = int_to_ptr.vmem [resolvable:$true] %s17
      %23 = dma.hbm_to_vmem [thread:$0]  %s1, 8192, %s18, [#allocation3], 256, 256, 16
    $region9: #{mlp_pallas.1} parent=1 // pred_fallthru
      _
    // Predicated region
    $region10: #{mlp_pallas.1} parent=1 // pred_check
      _
    $region11: #{mlp_pallas.1} parent=1 // pred_check_branch
      %25 = sbr.rel (0) target = $region13
    $region12: #{mlp_pallas.1} parent=1 // pred_region
      %s27 = ssub.s32 8192, 8192
      %28 = vsyncadd [#allocation5], %s27
      %s29 = sshll.u32 [#allocation4], 4
      %s30 = int_to_ptr.vmem [resolvable:$true] %s29
      %35 = dma.hbm_to_vmem [thread:$0]  %s2, 8192, %s30, [#allocation5], 128, 128, 8
    $region13: #{mlp_pallas.1} parent=1 // pred_fallthru
      _
    // Predicated region
    $region14: #{mlp_pallas.1} parent=1 // pred_check
      _
    $region15: #{mlp_pallas.1} parent=1 // pred_check_branch
      %37 = sbr.rel (0) target = $region17
    $region16: #{mlp_pallas.1} parent=1 // pred_region
      %38 = dma.done [#allocation3], 8192
    $region17: #{mlp_pallas.1} parent=1 // pred_fallthru
      _
    // Predicated region
    $region18: #{mlp_pallas.1} parent=1 // pred_check
      _
    $region19: #{mlp_pallas.1} parent=1 // pred_check_branch
      %40 = sbr.rel (0) target = $region21
    $region20: #{mlp_pallas.1} parent=1 // pred_region
      %41 = dma.done [#allocation5], 8192
    $region21: #{mlp_pallas.1} parent=1 // pred_fallthru
      _
    %v42 = vld [vmem:[%s0] sm:$0xff]
    %v43 = vld [vmem:[%s0 + $0x8] sm:$0xff]
    %v44 = vld [vmem:[%s0 + $0x10] sm:$0xff]
    %v45 = vld [vmem:[%s0 + $0x18] sm:$0xff]
    %v46 = vld [vmem:[%s0 + $0x20] sm:$0xff]
    %v47 = vld [vmem:[%s0 + $0x28] sm:$0xff]
    %v48 = vld [vmem:[%s0 + $0x30] sm:$0xff]
    %v49 = vld [vmem:[%s0 + $0x38] sm:$0xff]
    %v50 = vpack.c.bf16 %v44, %v42
    %v51 = vpack.c.bf16 %v45, %v43
    %v52 = vpack.c.bf16 %v48, %v46
    %v53 = vpack.c.bf16 %v49, %v47
    %v54 = vld [vmem:[#allocation2] sm:$0xff]
    %v55 = vld [vmem:[#allocation2 + $0x8] sm:$0xff]
    %v56 = vld [vmem:[#allocation2 + $0x10] sm:$0xff]
    %v57 = vld [vmem:[#allocation2 + $0x18] sm:$0xff]
    %v58 = vld [vmem:[#allocation2 + $0x20] sm:$0xff]
    %v59 = vld [vmem:[#allocation2 + $0x28] sm:$0xff]
    %v60 = vld [vmem:[#allocation2 + $0x30] sm:$0xff]
    %v61 = vld [vmem:[#allocation2 + $0x38] sm:$0xff]
    %v62 = vld [vmem:[#allocation2 + $0x40] sm:$0xff]
    %v63 = vld [vmem:[#allocation2 + $0x48] sm:$0xff]
    %v64 = vld [vmem:[#allocation2 + $0x50] sm:$0xff]
    %v65 = vld [vmem:[#allocation2 + $0x58] sm:$0xff]
    %v66 = vld [vmem:[#allocation2 + $0x60] sm:$0xff]
    %v67 = vld [vmem:[#allocation2 + $0x68] sm:$0xff]
    %v68 = vld [vmem:[#allocation2 + $0x70] sm:$0xff]
    %v69 = vld [vmem:[#allocation2 + $0x78] sm:$0xff]
    %v70 = vld [vmem:[#allocation2 + $0x80] sm:$0xff]
    %v71 = vld [vmem:[#allocation2 + $0x88] sm:$0xff]
    %v72 = vld [vmem:[#allocation2 + $0x90] sm:$0xff]
    %v73 = vld [vmem:[#allocation2 + $0x98] sm:$0xff]
    %v74 = vld [vmem:[#allocation2 + $0xa0] sm:$0xff]
    %v75 = vld [vmem:[#allocation2 + $0xa8] sm:$0xff]
    %v76 = vld [vmem:[#allocation2 + $0xb0] sm:$0xff]
    %v77 = vld [vmem:[#allocation2 + $0xb8] sm:$0xff]
    %v78 = vld [vmem:[#allocation2 + $0xc0] sm:$0xff]
    %v79 = vld [vmem:[#allocation2 + $0xc8] sm:$0xff]
    %v80 = vld [vmem:[#allocation2 + $0xd0] sm:$0xff]
    %v81 = vld [vmem:[#allocation2 + $0xd8] sm:$0xff]
    %v82 = vld [vmem:[#allocation2 + $0xe0] sm:$0xff]
    %v83 = vld [vmem:[#allocation2 + $0xe8] sm:$0xff]
    %v84 = vld [vmem:[#allocation2 + $0xf0] sm:$0xff]
    %v85 = vld [vmem:[#allocation2 + $0xf8] sm:$0xff]
    %v86 = vld [vmem:[#allocation2 + $0x100] sm:$0xff]
    %v87 = vld [vmem:[#allocation2 + $0x108] sm:$0xff]
    %v88 = vld [vmem:[#allocation2 + $0x110] sm:$0xff]
    %v89 = vld [vmem:[#allocation2 + $0x118] sm:$0xff]
    %v90 = vld [vmem:[#allocation2 + $0x120] sm:$0xff]
    %v91 = vld [vmem:[#allocation2 + $0x128] sm:$0xff]
    %v92 = vld [vmem:[#allocation2 + $0x130] sm:$0xff]
    %v93 = vld [vmem:[#allocation2 + $0x138] sm:$0xff]
    %v94 = vld [vmem:[#allocation2 + $0x140] sm:$0xff]
    %v95 = vld [vmem:[#allocation2 + $0x148] sm:$0xff]
    %v96 = vld [vmem:[#allocation2 + $0x150] sm:$0xff]
    %v97 = vld [vmem:[#allocation2 + $0x158] sm:$0xff]
    %v98 = vld [vmem:[#allocation2 + $0x160] sm:$0xff]
    %v99 = vld [vmem:[#allocation2 + $0x168] sm:$0xff]
    %v100 = vld [vmem:[#allocation2 + $0x170] sm:$0xff]
    %v101 = vld [vmem:[#allocation2 + $0x178] sm:$0xff]
    %v102 = vld [vmem:[#allocation2 + $0x180] sm:$0xff]
    %v103 = vld [vmem:[#allocation2 + $0x188] sm:$0xff]
    %v104 = vld [vmem:[#allocation2 + $0x190] sm:$0xff]
    %v105 = vld [vmem:[#allocation2 + $0x198] sm:$0xff]
    %v106 = vld [vmem:[#allocation2 + $0x1a0] sm:$0xff]
    %v107 = vld [vmem:[#allocation2 + $0x1a8] sm:$0xff]
    %v108 = vld [vmem:[#allocation2 + $0x1b0] sm:$0xff]
    %v109 = vld [vmem:[#allocation2 + $0x1b8] sm:$0xff]
    %v110 = vld [vmem:[#allocation2 + $0x1c0] sm:$0xff]
    %v111 = vld [vmem:[#allocation2 + $0x1c8] sm:$0xff]
    %v112 = vld [vmem:[#allocation2 + $0x1d0] sm:$0xff]
    %v113 = vld [vmem:[#allocation2 + $0x1d8] sm:$0xff]
    %v114 = vld [vmem:[#allocation2 + $0x1e0] sm:$0xff]
    %v115 = vld [vmem:[#allocation2 + $0x1e8] sm:$0xff]
    %v116 = vld [vmem:[#allocation2 + $0x1f0] sm:$0xff]
    %v117 = vld [vmem:[#allocation2 + $0x1f8] sm:$0xff]
    %v182 = vunpack.c.l.b16 %v54
    %v183 = vunpack.c.h.b16 %v54
    %v184 = vunpack.c.l.b16 %v55
    %v185 = vunpack.c.h.b16 %v55
    %v186 = vunpack.c.l.b16 %v56
    %v187 = vunpack.c.h.b16 %v56
    %v188 = vunpack.c.l.b16 %v57
    %v189 = vunpack.c.h.b16 %v57
    %v190 = vunpack.c.l.b16 %v58
    %v191 = vunpack.c.h.b16 %v58
    %v192 = vunpack.c.l.b16 %v59
    %v193 = vunpack.c.h.b16 %v59
    %v194 = vunpack.c.l.b16 %v60
    %v195 = vunpack.c.h.b16 %v60
    %v196 = vunpack.c.l.b16 %v61
    %v197 = vunpack.c.h.b16 %v61
    %v198 = vunpack.c.l.b16 %v62
    %v199 = vunpack.c.h.b16 %v62
    %v200 = vunpack.c.l.b16 %v63
    %v201 = vunpack.c.h.b16 %v63
    %v202 = vunpack.c.l.b16 %v64
    %v203 = vunpack.c.h.b16 %v64
    %v204 = vunpack.c.l.b16 %v65
    %v205 = vunpack.c.h.b16 %v65
    %v206 = vunpack.c.l.b16 %v66
    %v207 = vunpack.c.h.b16 %v66
    %v208 = vunpack.c.l.b16 %v67
    %v209 = vunpack.c.h.b16 %v67
    %v210 = vunpack.c.l.b16 %v68
    %v211 = vunpack.c.h.b16 %v68
    %v212 = vunpack.c.l.b16 %v69
    %v213 = vunpack.c.h.b16 %v69
    %v214 = vunpack.c.l.b16 %v70
    %v215 = vunpack.c.h.b16 %v70
    %v216 = vunpack.c.l.b16 %v71
    %v217 = vunpack.c.h.b16 %v71
    %v218 = vunpack.c.l.b16 %v72
    %v219 = vunpack.c.h.b16 %v72
    %v220 = vunpack.c.l.b16 %v73
    %v221 = vunpack.c.h.b16 %v73
    %v222 = vunpack.c.l.b16 %v74
    %v223 = vunpack.c.h.b16 %v74
    %v224 = vunpack.c.l.b16 %v75
    %v225 = vunpack.c.h.b16 %v75
    %v226 = vunpack.c.l.b16 %v76
    %v227 = vunpack.c.h.b16 %v76
    %v228 = vunpack.c.l.b16 %v77
    %v229 = vunpack.c.h.b16 %v77
    %v230 = vunpack.c.l.b16 %v78
    %v231 = vunpack.c.h.b16 %v78
    %v232 = vunpack.c.l.b16 %v79
    %v233 = vunpack.c.h.b16 %v79
    %v234 = vunpack.c.l.b16 %v80
    %v235 = vunpack.c.h.b16 %v80
    %v236 = vunpack.c.l.b16 %v81
    %v237 = vunpack.c.h.b16 %v81
    %v238 = vunpack.c.l.b16 %v82
    %v239 = vunpack.c.h.b16 %v82
    %v240 = vunpack.c.l.b16 %v83
    %v241 = vunpack.c.h.b16 %v83
    %v242 = vunpack.c.l.b16 %v84
    %v243 = vunpack.c.h.b16 %v84
    %v244 = vunpack.c.l.b16 %v85
    %v245 = vunpack.c.h.b16 %v85
    %v246 = vunpack.c.l.b16 %v86
    %v247 = vunpack.c.h.b16 %v86
    %v248 = vunpack.c.l.b16 %v87
    %v249 = vunpack.c.h.b16 %v87
    %v250 = vunpack.c.l.b16 %v88
    %v251 = vunpack.c.h.b16 %v88
    %v252 = vunpack.c.l.b16 %v89
    %v253 = vunpack.c.h.b16 %v89
    %v254 = vunpack.c.l.b16 %v90
    %v255 = vunpack.c.h.b16 %v90
    %v256 = vunpack.c.l.b16 %v91
    %v257 = vunpack.c.h.b16 %v91
    %v258 = vunpack.c.l.b16 %v92
    %v259 = vunpack.c.h.b16 %v92
    %v260 = vunpack.c.l.b16 %v93
    %v261 = vunpack.c.h.b16 %v93
    %v262 = vunpack.c.l.b16 %v94
    %v263 = vunpack.c.h.b16 %v94
    %v264 = vunpack.c.l.b16 %v95
    %v265 = vunpack.c.h.b16 %v95
    %v266 = vunpack.c.l.b16 %v96
    %v267 = vunpack.c.h.b16 %v96
    %v268 = vunpack.c.l.b16 %v97
    %v269 = vunpack.c.h.b16 %v97
    %v270 = vunpack.c.l.b16 %v98
    %v271 = vunpack.c.h.b16 %v98
    %v272 = vunpack.c.l.b16 %v99
    %v273 = vunpack.c.h.b16 %v99
    %v274 = vunpack.c.l.b16 %v100
    %v275 = vunpack.c.h.b16 %v100
    %v276 = vunpack.c.l.b16 %v101
    %v277 = vunpack.c.h.b16 %v101
    %v278 = vunpack.c.l.b16 %v102
    %v279 = vunpack.c.h.b16 %v102
    %v280 = vunpack.c.l.b16 %v103
    %v281 = vunpack.c.h.b16 %v103
    %v282 = vunpack.c.l.b16 %v104
    %v283 = vunpack.c.h.b16 %v104
    %v284 = vunpack.c.l.b16 %v105
    %v285 = vunpack.c.h.b16 %v105
    %v286 = vunpack.c.l.b16 %v106
    %v287 = vunpack.c.h.b16 %v106
    %v288 = vunpack.c.l.b16 %v107
    %v289 = vunpack.c.h.b16 %v107
    %v290 = vunpack.c.l.b16 %v108
    %v291 = vunpack.c.h.b16 %v108
    %v292 = vunpack.c.l.b16 %v109
    %v293 = vunpack.c.h.b16 %v109
    %v294 = vunpack.c.l.b16 %v110
    %v295 = vunpack.c.h.b16 %v110
    %v296 = vunpack.c.l.b16 %v111
    %v297 = vunpack.c.h.b16 %v111
    %v298 = vunpack.c.l.b16 %v112
    %v299 = vunpack.c.h.b16 %v112
    %v300 = vunpack.c.l.b16 %v113
    %v301 = vunpack.c.h.b16 %v113
    %v302 = vunpack.c.l.b16 %v114
    %v303 = vunpack.c.h.b16 %v114
    %v304 = vunpack.c.l.b16 %v115
    %v305 = vunpack.c.h.b16 %v115
    %v306 = vunpack.c.l.b16 %v116
    %v307 = vunpack.c.h.b16 %v116
    %v308 = vunpack.c.l.b16 %v117
    %v309 = vunpack.c.h.b16 %v117
    %v310 = vpack.c.b16 %v186, %v182
    %v311 = vpack.c.b16 %v187, %v183
    %v312 = vpack.c.b16 %v188, %v184
    %v313 = vpack.c.b16 %v189, %v185
    %v314 = vpack.c.b16 %v194, %v190
    %v315 = vpack.c.b16 %v195, %v191
    %v316 = vpack.c.b16 %v196, %v192
    %v317 = vpack.c.b16 %v197, %v193
    %v318 = vpack.c.b16 %v202, %v198
    %v319 = vpack.c.b16 %v203, %v199
    %v320 = vpack.c.b16 %v204, %v200
    %v321 = vpack.c.b16 %v205, %v201
    %v322 = vpack.c.b16 %v210, %v206
    %v323 = vpack.c.b16 %v211, %v207
    %v324 = vpack.c.b16 %v212, %v208
    %v325 = vpack.c.b16 %v213, %v209
    %v326 = vpack.c.b16 %v218, %v214
    %v327 = vpack.c.b16 %v219, %v215
    %v328 = vpack.c.b16 %v220, %v216
    %v329 = vpack.c.b16 %v221, %v217
    %v330 = vpack.c.b16 %v226, %v222
    %v331 = vpack.c.b16 %v227, %v223
    %v332 = vpack.c.b16 %v228, %v224
    %v333 = vpack.c.b16 %v229, %v225
    %v334 = vpack.c.b16 %v234, %v230
    %v335 = vpack.c.b16 %v235, %v231
    %v336 = vpack.c.b16 %v236, %v232
    %v337 = vpack.c.b16 %v237, %v233
    %v338 = vpack.c.b16 %v242, %v238
    %v339 = vpack.c.b16 %v243, %v239
    %v340 = vpack.c.b16 %v244, %v240
    %v341 = vpack.c.b16 %v245, %v241
    %v342 = vpack.c.b16 %v250, %v246
    %v343 = vpack.c.b16 %v251, %v247
    %v344 = vpack.c.b16 %v252, %v248
    %v345 = vpack.c.b16 %v253, %v249
    %v346 = vpack.c.b16 %v258, %v254
    %v347 = vpack.c.b16 %v259, %v255
    %v348 = vpack.c.b16 %v260, %v256
    %v349 = vpack.c.b16 %v261, %v257
    %v350 = vpack.c.b16 %v266, %v262
    %v351 = vpack.c.b16 %v267, %v263
    %v352 = vpack.c.b16 %v268, %v264
    %v353 = vpack.c.b16 %v269, %v265
    %v354 = vpack.c.b16 %v274, %v270
    %v355 = vpack.c.b16 %v275, %v271
    %v356 = vpack.c.b16 %v276, %v272
    %v357 = vpack.c.b16 %v277, %v273
    %v358 = vpack.c.b16 %v282, %v278
    %v359 = vpack.c.b16 %v283, %v279
    %v360 = vpack.c.b16 %v284, %v280
    %v361 = vpack.c.b16 %v285, %v281
    %v362 = vpack.c.b16 %v290, %v286
    %v363 = vpack.c.b16 %v291, %v287
    %v364 = vpack.c.b16 %v292, %v288
    %v365 = vpack.c.b16 %v293, %v289
    %v366 = vpack.c.b16 %v298, %v294
    %v367 = vpack.c.b16 %v299, %v295
    %v368 = vpack.c.b16 %v300, %v296
    %v369 = vpack.c.b16 %v301, %v297
    %v370 = vpack.c.b16 %v306, %v302
    %v371 = vpack.c.b16 %v307, %v303
    %v372 = vpack.c.b16 %v308, %v304
    %v373 = vpack.c.b16 %v309, %v305
    %438 = vmatprep.subr.bf16.mxu0 %v311
    %439 = vmatpush1.bf16.msra.mxu0 %v310
    %440 = vmatprep.subr.bf16.mxu0 %v315
    %441 = vmatpush1.bf16.msra.mxu0 %v314
    %442 = vmatprep.subr.bf16.mxu0 %v319
    %443 = vmatpush1.bf16.msra.mxu0 %v318
    %444 = vmatprep.subr.bf16.mxu0 %v323
    %445 = vmatpush1.bf16.msra.mxu0 %v322
    %446 = vmatprep.subr.bf16.mxu0 %v327
    %447 = vmatpush1.bf16.msra.mxu0 %v326
    %448 = vmatprep.subr.bf16.mxu0 %v331
    %449 = vmatpush1.bf16.msra.mxu0 %v330
    %450 = vmatprep.subr.bf16.mxu0 %v335
    %451 = vmatpush1.bf16.msra.mxu0 %v334
    %452 = vmatprep.subr.bf16.mxu0 %v339
    %453 = vmatpush1.bf16.msra.mxu0 %v338
    %454 = vmatprep.subr.bf16.mxu0 %v343
    %455 = vmatpush1.bf16.msra.mxu0 %v342
    %456 = vmatprep.subr.bf16.mxu0 %v347
    %457 = vmatpush1.bf16.msra.mxu0 %v346
    %458 = vmatprep.subr.bf16.mxu0 %v351
    %459 = vmatpush1.bf16.msra.mxu0 %v350
    %460 = vmatprep.subr.bf16.mxu0 %v355
    %461 = vmatpush1.bf16.msra.mxu0 %v354
    %462 = vmatprep.subr.bf16.mxu0 %v359
    %463 = vmatpush1.bf16.msra.mxu0 %v358
    %464 = vmatprep.subr.bf16.mxu0 %v363
    %465 = vmatpush1.bf16.msra.mxu0 %v362
    %466 = vmatprep.subr.bf16.mxu0 %v367
    %467 = vmatpush1.bf16.msra.mxu0 %v366
    %468 = vmatprep.subr.bf16.mxu0 %v371
    %469 = vmatpush1.bf16.msra.mxu0 %v370
    %470 = vmatprep.mubr.bf16.mxu0 %v51
    %471 = vmatmul.mubr.bf16.gmra.mrb[0].mxu0 %v50
    %v472 = vpop.f32.mrb[0].mxu0
    %v473 = vadd.f32 0.0, %v472
    %v474 = vpop.f32.mrb[0].mxu0
    %v475 = vadd.f32 0.0, %v474
    %v476 = vpop.f32.mrb[0].mxu0
    %v477 = vadd.f32 0.0, %v476
    %v478 = vpop.f32.mrb[0].mxu0
    %v479 = vadd.f32 0.0, %v478
    %480 = vmatprep.mubr.bf16.mxu0 %v53
    %481 = vmatmul.mubr.bf16.gmra.mrb[0].mxu0 %v52
    %v482 = vpop.f32.mrb[0].mxu0
    %v483 = vadd.f32 0.0, %v482
    %v484 = vpop.f32.mrb[0].mxu0
    %v485 = vadd.f32 0.0, %v484
    %v486 = vpop.f32.mrb[0].mxu0
    %v487 = vadd.f32 0.0, %v486
    %v488 = vpop.f32.mrb[0].mxu0
    %v489 = vadd.f32 0.0, %v488
    %490 = vdwg.mxu0
    %491 = vmatprep.subr.bf16.mxu0 %v313
    %492 = vmatpush1.bf16.msra.mxu0 %v312
    %493 = vmatprep.subr.bf16.mxu0 %v317
    %494 = vmatpush1.bf16.msra.mxu0 %v316
    %495 = vmatprep.subr.bf16.mxu0 %v321
    %496 = vmatpush1.bf16.msra.mxu0 %v320
    %497 = vmatprep.subr.bf16.mxu0 %v325
    %498 = vmatpush1.bf16.msra.mxu0 %v324
    %499 = vmatprep.subr.bf16.mxu0 %v329
    %500 = vmatpush1.bf16.msra.mxu0 %v328
    %501 = vmatprep.subr.bf16.mxu0 %v333
    %502 = vmatpush1.bf16.msra.mxu0 %v332
    %503 = vmatprep.subr.bf16.mxu0 %v337
    %504 = vmatpush1.bf16.msra.mxu0 %v336
    %505 = vmatprep.subr.bf16.mxu0 %v341
    %506 = vmatpush1.bf16.msra.mxu0 %v340
    %507 = vmatprep.subr.bf16.mxu0 %v345
    %508 = vmatpush1.bf16.msra.mxu0 %v344
    %509 = vmatprep.subr.bf16.mxu0 %v349
    %510 = vmatpush1.bf16.msra.mxu0 %v348
    %511 = vmatprep.subr.bf16.mxu0 %v353
    %512 = vmatpush1.bf16.msra.mxu0 %v352
    %513 = vmatprep.subr.bf16.mxu0 %v357
    %514 = vmatpush1.bf16.msra.mxu0 %v356
    %515 = vmatprep.subr.bf16.mxu0 %v361
    %516 = vmatpush1.bf16.msra.mxu0 %v360
    %517 = vmatprep.subr.bf16.mxu0 %v365
    %518 = vmatpush1.bf16.msra.mxu0 %v364
    %519 = vmatprep.subr.bf16.mxu0 %v369
    %520 = vmatpush1.bf16.msra.mxu0 %v368
    %521 = vmatprep.subr.bf16.mxu0 %v373
    %522 = vmatpush1.bf16.msra.mxu0 %v372
    %523 = vmatprep.mubr.bf16.mxu0 %v51
    %524 = vmatmul.mubr.bf16.gmra.mrb[0].mxu0 %v50
    %v525 = vpop.f32.mrb[0].mxu0
    %v526 = vadd.f32 0.0, %v525
    %v527 = vpop.f32.mrb[0].mxu0
    %v528 = vadd.f32 0.0, %v527
    %v529 = vpop.f32.mrb[0].mxu0
    %v530 = vadd.f32 0.0, %v529
    %v531 = vpop.f32.mrb[0].mxu0
    %v532 = vadd.f32 0.0, %v531
    %533 = vmatprep.mubr.bf16.mxu0 %v53
    %534 = vmatmul.mubr.bf16.gmra.mrb[0].mxu0 %v52
    %v535 = vpop.f32.mrb[0].mxu0
    %v536 = vadd.f32 0.0, %v535
    %v537 = vpop.f32.mrb[0].mxu0
    %v538 = vadd.f32 0.0, %v537
    %v539 = vpop.f32.mrb[0].mxu0
    %v540 = vadd.f32 0.0, %v539
    %v541 = vpop.f32.mrb[0].mxu0
    %v542 = vadd.f32 0.0, %v541
    %543 = vdwg.mxu0
    %v544 = vmul.f32 %v473, %v473
    %v545 = vmul.f32 %v475, %v475
    %v546 = vmul.f32 %v526, %v526
    %v547 = vmul.f32 %v528, %v528
    %v548 = vmul.f32 %v477, %v477
    %v549 = vmul.f32 %v479, %v479
    %v550 = vmul.f32 %v530, %v530
    %v551 = vmul.f32 %v532, %v532
    %v552 = vmul.f32 %v483, %v483
    %v553 = vmul.f32 %v485, %v485
    %v554 = vmul.f32 %v536, %v536
    %v555 = vmul.f32 %v538, %v538
    %v556 = vmul.f32 %v487, %v487
    %v557 = vmul.f32 %v489, %v489
    %v558 = vmul.f32 %v540, %v540
    %v559 = vmul.f32 %v542, %v542
    %v560 = vmul.f32 %v473, %v544
    %v561 = vmul.f32 %v475, %v545
    %v562 = vmul.f32 %v526, %v546
    %v563 = vmul.f32 %v528, %v547
    %v564 = vmul.f32 %v477, %v548
    %v565 = vmul.f32 %v479, %v549
    %v566 = vmul.f32 %v530, %v550
    %v567 = vmul.f32 %v532, %v551
    %v568 = vmul.f32 %v483, %v552
    %v569 = vmul.f32 %v485, %v553
    %v570 = vmul.f32 %v536, %v554
    %v571 = vmul.f32 %v538, %v555
    %v572 = vmul.f32 %v487, %v556
    %v573 = vmul.f32 %v489, %v557
    %v574 = vmul.f32 %v540, %v558
    %v575 = vmul.f32 %v542, %v559
    %v576 = vmul.f32 %v560, 0.044715
    %v577 = vmul.f32 %v561, 0.044715
    %v578 = vmul.f32 %v562, 0.044715
    %v579 = vmul.f32 %v563, 0.044715
    %v580 = vmul.f32 %v564, 0.044715
    %v581 = vmul.f32 %v565, 0.044715
    %v582 = vmul.f32 %v566, 0.044715
    %v583 = vmul.f32 %v567, 0.044715
    %v584 = vmul.f32 %v568, 0.044715
    %v585 = vmul.f32 %v569, 0.044715
    %v586 = vmul.f32 %v570, 0.044715
    %v587 = vmul.f32 %v571, 0.044715
    %v588 = vmul.f32 %v572, 0.044715
    %v589 = vmul.f32 %v573, 0.044715
    %v590 = vmul.f32 %v574, 0.044715
    %v591 = vmul.f32 %v575, 0.044715
    %v592 = vadd.f32 %v473, %v576
    %v593 = vadd.f32 %v475, %v577
    %v594 = vadd.f32 %v526, %v578
    %v595 = vadd.f32 %v528, %v579
    %v596 = vadd.f32 %v477, %v580
    %v597 = vadd.f32 %v479, %v581
    %v598 = vadd.f32 %v530, %v582
    %v599 = vadd.f32 %v532, %v583
    %v600 = vadd.f32 %v483, %v584
    %v601 = vadd.f32 %v485, %v585
    %v602 = vadd.f32 %v536, %v586
    %v603 = vadd.f32 %v538, %v587
    %v604 = vadd.f32 %v487, %v588
    %v605 = vadd.f32 %v489, %v589
    %v606 = vadd.f32 %v540, %v590
    %v607 = vadd.f32 %v542, %v591
    %v608 = vmul.f32 %v592, 0.7978846
    %v609 = vmul.f32 %v593, 0.7978846
    %v610 = vmul.f32 %v594, 0.7978846
    %v611 = vmul.f32 %v595, 0.7978846
    %v612 = vmul.f32 %v596, 0.7978846
    %v613 = vmul.f32 %v597, 0.7978846
    %v614 = vmul.f32 %v598, 0.7978846
    %v615 = vmul.f32 %v599, 0.7978846
    %v616 = vmul.f32 %v600, 0.7978846
    %v617 = vmul.f32 %v601, 0.7978846
    %v618 = vmul.f32 %v602, 0.7978846
    %v619 = vmul.f32 %v603, 0.7978846
    %v620 = vmul.f32 %v604, 0.7978846
    %v621 = vmul.f32 %v605, 0.7978846
    %v622 = vmul.f32 %v606, 0.7978846
    %v623 = vmul.f32 %v607, 0.7978846
    %v624 = vtanh.pop %v608
    %v625 = vtanh.pop %v609
    %v626 = vtanh.pop %v610
    %v627 = vtanh.pop %v611
    %v628 = vtanh.pop %v612
    %v629 = vtanh.pop %v613
    %v630 = vtanh.pop %v614
    %v631 = vtanh.pop %v615
    %v632 = vtanh.pop %v616
    %v633 = vtanh.pop %v617
    %v634 = vtanh.pop %v618
    %v635 = vtanh.pop %v619
    %v636 = vtanh.pop %v620
    %v637 = vtanh.pop %v621
    %v638 = vtanh.pop %v622
    %v639 = vtanh.pop %v623
    %v640 = vadd.f32 %v624, 1.0
    %v641 = vadd.f32 %v625, 1.0
    %v642 = vadd.f32 %v626, 1.0
    %v643 = vadd.f32 %v627, 1.0
    %v644 = vadd.f32 %v628, 1.0
    %v645 = vadd.f32 %v629, 1.0
    %v646 = vadd.f32 %v630, 1.0
    %v647 = vadd.f32 %v631, 1.0
    %v648 = vadd.f32 %v632, 1.0
    %v649 = vadd.f32 %v633, 1.0
    %v650 = vadd.f32 %v634, 1.0
    %v651 = vadd.f32 %v635, 1.0
    %v652 = vadd.f32 %v636, 1.0
    %v653 = vadd.f32 %v637, 1.0
    %v654 = vadd.f32 %v638, 1.0
    %v655 = vadd.f32 %v639, 1.0
    %v656 = vmul.f32 %v640, 0.5
    %v657 = vmul.f32 %v641, 0.5
    %v658 = vmul.f32 %v642, 0.5
    %v659 = vmul.f32 %v643, 0.5
    %v660 = vmul.f32 %v644, 0.5
    %v661 = vmul.f32 %v645, 0.5
    %v662 = vmul.f32 %v646, 0.5
    %v663 = vmul.f32 %v647, 0.5
    %v664 = vmul.f32 %v648, 0.5
    %v665 = vmul.f32 %v649, 0.5
    %v666 = vmul.f32 %v650, 0.5
    %v667 = vmul.f32 %v651, 0.5
    %v668 = vmul.f32 %v652, 0.5
    %v669 = vmul.f32 %v653, 0.5
    %v670 = vmul.f32 %v654, 0.5
    %v671 = vmul.f32 %v655, 0.5
    %v672 = vmul.f32 %v473, %v656
    %v673 = vmul.f32 %v475, %v657
    %v674 = vmul.f32 %v526, %v658
    %v675 = vmul.f32 %v528, %v659
    %v676 = vmul.f32 %v477, %v660
    %v677 = vmul.f32 %v479, %v661
    %v678 = vmul.f32 %v530, %v662
    %v679 = vmul.f32 %v532, %v663
    %v680 = vmul.f32 %v483, %v664
    %v681 = vmul.f32 %v485, %v665
    %v682 = vmul.f32 %v536, %v666
    %v683 = vmul.f32 %v538, %v667
    %v684 = vmul.f32 %v487, %v668
    %v685 = vmul.f32 %v489, %v669
    %v686 = vmul.f32 %v540, %v670
    %v687 = vmul.f32 %v542, %v671
    %v688 = vpack.c.bf16 %v676, %v672
    %v689 = vpack.c.bf16 %v677, %v673
    %v690 = vpack.c.bf16 %v678, %v674
    %v691 = vpack.c.bf16 %v679, %v675
    %v692 = vpack.c.bf16 %v684, %v680
    %v693 = vpack.c.bf16 %v685, %v681
    %v694 = vpack.c.bf16 %v686, %v682
    %v695 = vpack.c.bf16 %v687, %v683
    %v696 = vld [vmem:[#allocation4] sm:$0xff]
    %v697 = vld [vmem:[#allocation4 + $0x8] sm:$0xff]
    %v698 = vld [vmem:[#allocation4 + $0x10] sm:$0xff]
    %v699 = vld [vmem:[#allocation4 + $0x18] sm:$0xff]
    %v700 = vld [vmem:[#allocation4 + $0x20] sm:$0xff]
    %v701 = vld [vmem:[#allocation4 + $0x28] sm:$0xff]
    %v702 = vld [vmem:[#allocation4 + $0x30] sm:$0xff]
    %v703 = vld [vmem:[#allocation4 + $0x38] sm:$0xff]
    %v704 = vld [vmem:[#allocation4 + $0x40] sm:$0xff]
    %v705 = vld [vmem:[#allocation4 + $0x48] sm:$0xff]
    %v706 = vld [vmem:[#allocation4 + $0x50] sm:$0xff]
    %v707 = vld [vmem:[#allocation4 + $0x58] sm:$0xff]
    %v708 = vld [vmem:[#allocation4 + $0x60] sm:$0xff]
    %v709 = vld [vmem:[#allocation4 + $0x68] sm:$0xff]
    %v710 = vld [vmem:[#allocation4 + $0x70] sm:$0xff]
    %v711 = vld [vmem:[#allocation4 + $0x78] sm:$0xff]
    %v712 = vld [vmem:[#allocation4 + $0x80] sm:$0xff]
    %v713 = vld [vmem:[#allocation4 + $0x88] sm:$0xff]
    %v714 = vld [vmem:[#allocation4 + $0x90] sm:$0xff]
    %v715 = vld [vmem:[#allocation4 + $0x98] sm:$0xff]
    %v716 = vld [vmem:[#allocation4 + $0xa0] sm:$0xff]
    %v717 = vld [vmem:[#allocation4 + $0xa8] sm:$0xff]
    %v718 = vld [vmem:[#allocation4 + $0xb0] sm:$0xff]
    %v719 = vld [vmem:[#allocation4 + $0xb8] sm:$0xff]
    %v720 = vld [vmem:[#allocation4 + $0xc0] sm:$0xff]
    %v721 = vld [vmem:[#allocation4 + $0xc8] sm:$0xff]
    %v722 = vld [vmem:[#allocation4 + $0xd0] sm:$0xff]
    %v723 = vld [vmem:[#allocation4 + $0xd8] sm:$0xff]
    %v724 = vld [vmem:[#allocation4 + $0xe0] sm:$0xff]
    %v725 = vld [vmem:[#allocation4 + $0xe8] sm:$0xff]
    %v726 = vld [vmem:[#allocation4 + $0xf0] sm:$0xff]
    %v727 = vld [vmem:[#allocation4 + $0xf8] sm:$0xff]
    %v728 = vld [vmem:[#allocation4 + $0x100] sm:$0xff]
    %v729 = vld [vmem:[#allocation4 + $0x108] sm:$0xff]
    %v730 = vld [vmem:[#allocation4 + $0x110] sm:$0xff]
    %v731 = vld [vmem:[#allocation4 + $0x118] sm:$0xff]
    %v732 = vld [vmem:[#allocation4 + $0x120] sm:$0xff]
    %v733 = vld [vmem:[#allocation4 + $0x128] sm:$0xff]
    %v734 = vld [vmem:[#allocation4 + $0x130] sm:$0xff]
    %v735 = vld [vmem:[#allocation4 + $0x138] sm:$0xff]
    %v736 = vld [vmem:[#allocation4 + $0x140] sm:$0xff]
    %v737 = vld [vmem:[#allocation4 + $0x148] sm:$0xff]
    %v738 = vld [vmem:[#allocation4 + $0x150] sm:$0xff]
    %v739 = vld [vmem:[#allocation4 + $0x158] sm:$0xff]
    %v740 = vld [vmem:[#allocation4 + $0x160] sm:$0xff]
    %v741 = vld [vmem:[#allocation4 + $0x168] sm:$0xff]
    %v742 = vld [vmem:[#allocation4 + $0x170] sm:$0xff]
    %v743 = vld [vmem:[#allocation4 + $0x178] sm:$0xff]
    %v744 = vld [vmem:[#allocation4 + $0x180] sm:$0xff]
    %v745 = vld [vmem:[#allocation4 + $0x188] sm:$0xff]
    %v746 = vld [vmem:[#allocation4 + $0x190] sm:$0xff]
    %v747 = vld [vmem:[#allocation4 + $0x198] sm:$0xff]
    %v748 = vld [vmem:[#allocation4 + $0x1a0] sm:$0xff]
    %v749 = vld [vmem:[#allocation4 + $0x1a8] sm:$0xff]
    %v750 = vld [vmem:[#allocation4 + $0x1b0] sm:$0xff]
    %v751 = vld [vmem:[#allocation4 + $0x1b8] sm:$0xff]
    %v752 = vld [vmem:[#allocation4 + $0x1c0] sm:$0xff]
    %v753 = vld [vmem:[#allocation4 + $0x1c8] sm:$0xff]
    %v754 = vld [vmem:[#allocation4 + $0x1d0] sm:$0xff]
    %v755 = vld [vmem:[#allocation4 + $0x1d8] sm:$0xff]
    %v756 = vld [vmem:[#allocation4 + $0x1e0] sm:$0xff]
    %v757 = vld [vmem:[#allocation4 + $0x1e8] sm:$0xff]
    %v758 = vld [vmem:[#allocation4 + $0x1f0] sm:$0xff]
    %v759 = vld [vmem:[#allocation4 + $0x1f8] sm:$0xff]
    %v824 = vunpack.c.l.b16 %v696
    %v825 = vunpack.c.h.b16 %v696
    %v826 = vunpack.c.l.b16 %v697
    %v827 = vunpack.c.h.b16 %v697
    %v828 = vunpack.c.l.b16 %v698
    %v829 = vunpack.c.h.b16 %v698
    %v830 = vunpack.c.l.b16 %v699
    %v831 = vunpack.c.h.b16 %v699
    %v832 = vunpack.c.l.b16 %v700
    %v833 = vunpack.c.h.b16 %v700
    %v834 = vunpack.c.l.b16 %v701
    %v835 = vunpack.c.h.b16 %v701
    %v836 = vunpack.c.l.b16 %v702
    %v837 = vunpack.c.h.b16 %v702
    %v838 = vunpack.c.l.b16 %v703
    %v839 = vunpack.c.h.b16 %v703
    %v840 = vunpack.c.l.b16 %v704
    %v841 = vunpack.c.h.b16 %v704
    %v842 = vunpack.c.l.b16 %v705
    %v843 = vunpack.c.h.b16 %v705
    %v844 = vunpack.c.l.b16 %v706
    %v845 = vunpack.c.h.b16 %v706
    %v846 = vunpack.c.l.b16 %v707
    %v847 = vunpack.c.h.b16 %v707
    %v848 = vunpack.c.l.b16 %v708
    %v849 = vunpack.c.h.b16 %v708
    %v850 = vunpack.c.l.b16 %v709
    %v851 = vunpack.c.h.b16 %v709
    %v852 = vunpack.c.l.b16 %v710
    %v853 = vunpack.c.h.b16 %v710
    %v854 = vunpack.c.l.b16 %v711
    %v855 = vunpack.c.h.b16 %v711
    %v856 = vunpack.c.l.b16 %v712
    %v857 = vunpack.c.h.b16 %v712
    %v858 = vunpack.c.l.b16 %v713
    %v859 = vunpack.c.h.b16 %v713
    %v860 = vunpack.c.l.b16 %v714
    %v861 = vunpack.c.h.b16 %v714
    %v862 = vunpack.c.l.b16 %v715
    %v863 = vunpack.c.h.b16 %v715
    %v864 = vunpack.c.l.b16 %v716
    %v865 = vunpack.c.h.b16 %v716
    %v866 = vunpack.c.l.b16 %v717
    %v867 = vunpack.c.h.b16 %v717
    %v868 = vunpack.c.l.b16 %v718
    %v869 = vunpack.c.h.b16 %v718
    %v870 = vunpack.c.l.b16 %v719
    %v871 = vunpack.c.h.b16 %v719
    %v872 = vunpack.c.l.b16 %v720
    %v873 = vunpack.c.h.b16 %v720
    %v874 = vunpack.c.l.b16 %v721
    %v875 = vunpack.c.h.b16 %v721
    %v876 = vunpack.c.l.b16 %v722
    %v877 = vunpack.c.h.b16 %v722
    %v878 = vunpack.c.l.b16 %v723
    %v879 = vunpack.c.h.b16 %v723
    %v880 = vunpack.c.l.b16 %v724
    %v881 = vunpack.c.h.b16 %v724
    %v882 = vunpack.c.l.b16 %v725
    %v883 = vunpack.c.h.b16 %v725
    %v884 = vunpack.c.l.b16 %v726
    %v885 = vunpack.c.h.b16 %v726
    %v886 = vunpack.c.l.b16 %v727
    %v887 = vunpack.c.h.b16 %v727
    %v888 = vunpack.c.l.b16 %v728
    %v889 = vunpack.c.h.b16 %v728
    %v890 = vunpack.c.l.b16 %v729
    %v891 = vunpack.c.h.b16 %v729
    %v892 = vunpack.c.l.b16 %v730
    %v893 = vunpack.c.h.b16 %v730
    %v894 = vunpack.c.l.b16 %v731
    %v895 = vunpack.c.h.b16 %v731
    %v896 = vunpack.c.l.b16 %v732
    %v897 = vunpack.c.h.b16 %v732
    %v898 = vunpack.c.l.b16 %v733
    %v899 = vunpack.c.h.b16 %v733
    %v900 = vunpack.c.l.b16 %v734
    %v901 = vunpack.c.h.b16 %v734
    %v902 = vunpack.c.l.b16 %v735
    %v903 = vunpack.c.h.b16 %v735
    %v904 = vunpack.c.l.b16 %v736
    %v905 = vunpack.c.h.b16 %v736
    %v906 = vunpack.c.l.b16 %v737
    %v907 = vunpack.c.h.b16 %v737
    %v908 = vunpack.c.l.b16 %v738
    %v909 = vunpack.c.h.b16 %v738
    %v910 = vunpack.c.l.b16 %v739
    %v911 = vunpack.c.h.b16 %v739
    %v912 = vunpack.c.l.b16 %v740
    %v913 = vunpack.c.h.b16 %v740
    %v914 = vunpack.c.l.b16 %v741
    %v915 = vunpack.c.h.b16 %v741
    %v916 = vunpack.c.l.b16 %v742
    %v917 = vunpack.c.h.b16 %v742
    %v918 = vunpack.c.l.b16 %v743
    %v919 = vunpack.c.h.b16 %v743
    %v920 = vunpack.c.l.b16 %v744
    %v921 = vunpack.c.h.b16 %v744
    %v922 = vunpack.c.l.b16 %v745
    %v923 = vunpack.c.h.b16 %v745
    %v924 = vunpack.c.l.b16 %v746
    %v925 = vunpack.c.h.b16 %v746
    %v926 = vunpack.c.l.b16 %v747
    %v927 = vunpack.c.h.b16 %v747
    %v928 = vunpack.c.l.b16 %v748
    %v929 = vunpack.c.h.b16 %v748
    %v930 = vunpack.c.l.b16 %v749
    %v931 = vunpack.c.h.b16 %v749
    %v932 = vunpack.c.l.b16 %v750
    %v933 = vunpack.c.h.b16 %v750
    %v934 = vunpack.c.l.b16 %v751
    %v935 = vunpack.c.h.b16 %v751
    %v936 = vunpack.c.l.b16 %v752
    %v937 = vunpack.c.h.b16 %v752
    %v938 = vunpack.c.l.b16 %v753
    %v939 = vunpack.c.h.b16 %v753
    %v940 = vunpack.c.l.b16 %v754
    %v941 = vunpack.c.h.b16 %v754
    %v942 = vunpack.c.l.b16 %v755
    %v943 = vunpack.c.h.b16 %v755
    %v944 = vunpack.c.l.b16 %v756
    %v945 = vunpack.c.h.b16 %v756
    %v946 = vunpack.c.l.b16 %v757
    %v947 = vunpack.c.h.b16 %v757
    %v948 = vunpack.c.l.b16 %v758
    %v949 = vunpack.c.h.b16 %v758
    %v950 = vunpack.c.l.b16 %v759
    %v951 = vunpack.c.h.b16 %v759
    %v952 = vpack.c.b16 %v826, %v824
    %v953 = vpack.c.b16 %v827, %v825
    %v954 = vpack.c.b16 %v830, %v828
    %v955 = vpack.c.b16 %v831, %v829
    %v956 = vpack.c.b16 %v834, %v832
    %v957 = vpack.c.b16 %v835, %v833
    %v958 = vpack.c.b16 %v838, %v836
    %v959 = vpack.c.b16 %v839, %v837
    %v960 = vpack.c.b16 %v842, %v840
    %v961 = vpack.c.b16 %v843, %v841
    %v962 = vpack.c.b16 %v846, %v844
    %v963 = vpack.c.b16 %v847, %v845
    %v964 = vpack.c.b16 %v850, %v848
    %v965 = vpack.c.b16 %v851, %v849
    %v966 = vpack.c.b16 %v854, %v852
    %v967 = vpack.c.b16 %v855, %v853
    %v968 = vpack.c.b16 %v858, %v856
    %v969 = vpack.c.b16 %v859, %v857
    %v970 = vpack.c.b16 %v862, %v860
    %v971 = vpack.c.b16 %v863, %v861
    %v972 = vpack.c.b16 %v866, %v864
    %v973 = vpack.c.b16 %v867, %v865
    %v974 = vpack.c.b16 %v870, %v868
    %v975 = vpack.c.b16 %v871, %v869
    %v976 = vpack.c.b16 %v874, %v872
    %v977 = vpack.c.b16 %v875, %v873
    %v978 = vpack.c.b16 %v878, %v876
    %v979 = vpack.c.b16 %v879, %v877
    %v980 = vpack.c.b16 %v882, %v880
    %v981 = vpack.c.b16 %v883, %v881
    %v982 = vpack.c.b16 %v886, %v884
    %v983 = vpack.c.b16 %v887, %v885
    %v984 = vpack.c.b16 %v890, %v888
    %v985 = vpack.c.b16 %v891, %v889
    %v986 = vpack.c.b16 %v894, %v892
    %v987 = vpack.c.b16 %v895, %v893
    %v988 = vpack.c.b16 %v898, %v896
    %v989 = vpack.c.b16 %v899, %v897
    %v990 = vpack.c.b16 %v902, %v900
    %v991 = vpack.c.b16 %v903, %v901
    %v992 = vpack.c.b16 %v906, %v904
    %v993 = vpack.c.b16 %v907, %v905
    %v994 = vpack.c.b16 %v910, %v908
    %v995 = vpack.c.b16 %v911, %v909
    %v996 = vpack.c.b16 %v914, %v912
    %v997 = vpack.c.b16 %v915, %v913
    %v998 = vpack.c.b16 %v918, %v916
    %v999 = vpack.c.b16 %v919, %v917
    %v1000 = vpack.c.b16 %v922, %v920
    %v1001 = vpack.c.b16 %v923, %v921
    %v1002 = vpack.c.b16 %v926, %v924
    %v1003 = vpack.c.b16 %v927, %v925
    %v1004 = vpack.c.b16 %v930, %v928
    %v1005 = vpack.c.b16 %v931, %v929
    %v1006 = vpack.c.b16 %v934, %v932
    %v1007 = vpack.c.b16 %v935, %v933
    %v1008 = vpack.c.b16 %v938, %v936
    %v1009 = vpack.c.b16 %v939, %v937
    %v1010 = vpack.c.b16 %v942, %v940
    %v1011 = vpack.c.b16 %v943, %v941
    %v1012 = vpack.c.b16 %v946, %v944
    %v1013 = vpack.c.b16 %v947, %v945
    %v1014 = vpack.c.b16 %v950, %v948
    %v1015 = vpack.c.b16 %v951, %v949
    %1080 = vmatprep.subr.bf16.mxu0 %v953
    %1081 = vmatpush1.bf16.msra.mxu0 %v952
    %1082 = vmatprep.subr.bf16.mxu0 %v955
    %1083 = vmatpush1.bf16.msra.mxu0 %v954
    %1084 = vmatprep.subr.bf16.mxu0 %v957
    %1085 = vmatpush1.bf16.msra.mxu0 %v956
    %1086 = vmatprep.subr.bf16.mxu0 %v959
    %1087 = vmatpush1.bf16.msra.mxu0 %v958
    %1088 = vmatprep.subr.bf16.mxu0 %v961
    %1089 = vmatpush1.bf16.msra.mxu0 %v960
    %1090 = vmatprep.subr.bf16.mxu0 %v963
    %1091 = vmatpush1.bf16.msra.mxu0 %v962
    %1092 = vmatprep.subr.bf16.mxu0 %v965
    %1093 = vmatpush1.bf16.msra.mxu0 %v964
    %1094 = vmatprep.subr.bf16.mxu0 %v967
    %1095 = vmatpush1.bf16.msra.mxu0 %v966
    %1096 = vmatprep.subr.bf16.mxu0 %v969
    %1097 = vmatpush1.bf16.msra.mxu0 %v968
    %1098 = vmatprep.subr.bf16.mxu0 %v971
    %1099 = vmatpush1.bf16.msra.mxu0 %v970
    %1100 = vmatprep.subr.bf16.mxu0 %v973
    %1101 = vmatpush1.bf16.msra.mxu0 %v972
    %1102 = vmatprep.subr.bf16.mxu0 %v975
    %1103 = vmatpush1.bf16.msra.mxu0 %v974
    %1104 = vmatprep.subr.bf16.mxu0 %v977
    %1105 = vmatpush1.bf16.msra.mxu0 %v976
    %1106 = vmatprep.subr.bf16.mxu0 %v979
    %1107 = vmatpush1.bf16.msra.mxu0 %v978
    %1108 = vmatprep.subr.bf16.mxu0 %v981
    %1109 = vmatpush1.bf16.msra.mxu0 %v980
    %1110 = vmatprep.subr.bf16.mxu0 %v983
    %1111 = vmatpush1.bf16.msra.mxu0 %v982
    %1112 = vmatprep.mubr.bf16.mxu0 %v689
    %1113 = vmatmul.mubr.bf16.gmra.mrb[0].mxu0 %v688
    %v1114 = vpop.f32.mrb[0].mxu0
    %v1115 = vadd.f32 0.0, %v1114
    %v1116 = vpop.f32.mrb[0].mxu0
    %v1117 = vadd.f32 0.0, %v1116
    %v1118 = vpop.f32.mrb[0].mxu0
    %v1119 = vadd.f32 0.0, %v1118
    %v1120 = vpop.f32.mrb[0].mxu0
    %v1121 = vadd.f32 0.0, %v1120
    %1122 = vmatprep.mubr.bf16.mxu0 %v693
    %1123 = vmatmul.mubr.bf16.gmra.mrb[0].mxu0 %v692
    %v1124 = vpop.f32.mrb[0].mxu0
    %v1125 = vadd.f32 0.0, %v1124
    %v1126 = vpop.f32.mrb[0].mxu0
    %v1127 = vadd.f32 0.0, %v1126
    %v1128 = vpop.f32.mrb[0].mxu0
    %v1129 = vadd.f32 0.0, %v1128
    %v1130 = vpop.f32.mrb[0].mxu0
    %v1131 = vadd.f32 0.0, %v1130
    %1132 = vdwg.mxu0
    %1133 = vmatprep.subr.bf16.mxu0 %v985
    %1134 = vmatpush1.bf16.msra.mxu0 %v984
    %1135 = vmatprep.subr.bf16.mxu0 %v987
    %1136 = vmatpush1.bf16.msra.mxu0 %v986
    %1137 = vmatprep.subr.bf16.mxu0 %v989
    %1138 = vmatpush1.bf16.msra.mxu0 %v988
    %1139 = vmatprep.subr.bf16.mxu0 %v991
    %1140 = vmatpush1.bf16.msra.mxu0 %v990
    %1141 = vmatprep.subr.bf16.mxu0 %v993
    %1142 = vmatpush1.bf16.msra.mxu0 %v992
    %1143 = vmatprep.subr.bf16.mxu0 %v995
    %1144 = vmatpush1.bf16.msra.mxu0 %v994
    %1145 = vmatprep.subr.bf16.mxu0 %v997
    %1146 = vmatpush1.bf16.msra.mxu0 %v996
    %1147 = vmatprep.subr.bf16.mxu0 %v999
    %1148 = vmatpush1.bf16.msra.mxu0 %v998
    %1149 = vmatprep.subr.bf16.mxu0 %v1001
    %1150 = vmatpush1.bf16.msra.mxu0 %v1000
    %1151 = vmatprep.subr.bf16.mxu0 %v1003
    %1152 = vmatpush1.bf16.msra.mxu0 %v1002
    %1153 = vmatprep.subr.bf16.mxu0 %v1005
    %1154 = vmatpush1.bf16.msra.mxu0 %v1004
    %1155 = vmatprep.subr.bf16.mxu0 %v1007
    %1156 = vmatpush1.bf16.msra.mxu0 %v1006
    %1157 = vmatprep.subr.bf16.mxu0 %v1009
    %1158 = vmatpush1.bf16.msra.mxu0 %v1008
    %1159 = vmatprep.subr.bf16.mxu0 %v1011
    %1160 = vmatpush1.bf16.msra.mxu0 %v1010
    %1161 = vmatprep.subr.bf16.mxu0 %v1013
    %1162 = vmatpush1.bf16.msra.mxu0 %v1012
    %1163 = vmatprep.subr.bf16.mxu0 %v1015
    %1164 = vmatpush1.bf16.msra.mxu0 %v1014
    %1165 = vmatprep.mubr.bf16.mxu0 %v691
    %1166 = vmatmul.mubr.bf16.gmra.mrb[0].mxu0 %v690
    %v1167 = vpop.f32.mrb[0].mxu0
    %v1168 = vadd.f32 %v1115, %v1167
    %v1169 = vpop.f32.mrb[0].mxu0
    %v1170 = vadd.f32 %v1117, %v1169
    %v1171 = vpop.f32.mrb[0].mxu0
    %v1172 = vadd.f32 %v1119, %v1171
    %v1173 = vpop.f32.mrb[0].mxu0
    %v1174 = vadd.f32 %v1121, %v1173
    %1175 = vmatprep.mubr.bf16.mxu0 %v695
    %1176 = vmatmul.mubr.bf16.gmra.mrb[0].mxu0 %v694
    %v1177 = vpop.f32.mrb[0].mxu0
    %v1178 = vadd.f32 %v1125, %v1177
    %v1179 = vpop.f32.mrb[0].mxu0
    %v1180 = vadd.f32 %v1127, %v1179
    %v1181 = vpop.f32.mrb[0].mxu0
    %v1182 = vadd.f32 %v1129, %v1181
    %v1183 = vpop.f32.mrb[0].mxu0
    %v1184 = vadd.f32 %v1131, %v1183
    %1185 = vdwg.mxu0
    %1186 = vst [vmem:[%s3] sm:$0xff] %v1168
    %1187 = vst [vmem:[%s3 + $0x8] sm:$0xff] %v1170
    %1188 = vst [vmem:[%s3 + $0x10] sm:$0xff] %v1172
    %1189 = vst [vmem:[%s3 + $0x18] sm:$0xff] %v1174
    %1190 = vst [vmem:[%s3 + $0x20] sm:$0xff] %v1178
    %1191 = vst [vmem:[%s3 + $0x28] sm:$0xff] %v1180
    %1192 = vst [vmem:[%s3 + $0x30] sm:$0xff] %v1182
    %1193 = vst [vmem:[%s3 + $0x38] sm:$0xff] %v1184
    // Predicated region
    $region22: #{mlp_pallas.1} parent=1 // pred_check
      _
    $region23: #{mlp_pallas.1} parent=1 // pred_check_branch
      %1195 = sbr.rel (0) target = $region25
    $region24: #{mlp_pallas.1} parent=1 // pred_region
      _
    $region25: #{mlp_pallas.1} parent=1 // pred_fallthru
      _
    // Predicated region
    $region26: #{mlp_pallas.1} parent=1 // pred_check
      _
    $region27: #{mlp_pallas.1} parent=1 // pred_check_branch
      %1197 = sbr.rel (0) target = $region29
    $region28: #{mlp_pallas.1} parent=1 // pred_region
      _
    $region29: #{mlp_pallas.1} parent=1 // pred_fallthru
      _
    %1198 = vsyncpa [#allocation3], 1
    %1199 = vsyncpa [#allocation5], 1

</llo_original>
